<compile_context>
chip_gen: v6e
topology: v6e:2x2x1
jax: 0.10.0
libtpu: 0.0.40
codegen_flags: <defaults>
</compile_context>

<pallas_src>
import functools

import jax
import jax.numpy as jnp
from jax.experimental import pallas as pl
from jax.experimental.pallas import tpu as pltpu


def _mean_variance_kernel(mt_ref, x_ref, t_ref, se_ref, var_ref, *, age_mid):
    x = x_ref[...].astype(jnp.float32)          # (tile_n, C)  logits tile
    t = t_ref[...].astype(jnp.float32)          # (1, tile_n)  lane-dense targets
    mt = mt_ref[...]                            # (8, C): rows [1, a', a'^2, 0...]

    # Numerically stable un-normalized softmax weights.
    m = jnp.max(x, axis=1, keepdims=True)       # (tile_n, 1)   XLU reduce
    e = jnp.exp(x - m)                          # (tile_n, C)   EUP

    # One MXU matmul produces all three (centered) moments, lane-dense over
    # the batch:  moments[k, n] = sum_c mt[k, c] * e[n, c]
    moments = jax.lax.dot_general(
        mt, e, (((1,), (1,)), ((), ())),
        preferred_element_type=jnp.float32)     # (8, tile_n)
    s0 = moments[0:1, :]                        # sum_c e
    s1 = moments[1:2, :]                        # sum_c e * a'
    s2 = moments[2:3, :]                        # sum_c e * a'^2

    inv_s0 = pl.reciprocal(s0, approx=False)    # exact; negligible vs. the exps
    mean_c = s1 * inv_s0                        # E[a']            (1, tile_n)
    var = s2 * inv_s0 - mean_c * mean_c         # shift-invariant  (1, tile_n)
    diff = mean_c + jnp.float32(age_mid) - t    # E[a] - target

    # Lane-dense per-row outputs; padded rows of a partial edge tile are
    # computed but never written back to HBM (edge-block writeback clamps).
    se_ref[...] = diff * diff
    var_ref[...] = var


def _pick_tile_rows(n, c, itemsize, max_tile_rows=None):
    """Dtype-aware batch tile: ~2 MiB per pipelined logits buffer."""
    if max_tile_rows is None:
        budget = 2 * 1024 * 1024                # bytes per logits buffer
        max_tile_rows = max(128, budget // (c * itemsize))
    if n <= max_tile_rows:
        return n                                # single block == full array dims
    return max(128, (int(max_tile_rows) // 128) * 128)


def mean_variance_loss_mtl(logits, target, *, start_age, end_age,
                           max_tile_rows=None):
    """JAX/Pallas equivalent of MeanVarianceLossMTL.forward.

    logits: (N, C) with C == end_age - start_age + 1 (f32 or bf16)
    target: (N,) labels (any numeric dtype; upcast to f32 inside the kernel)
    returns: (mean_loss, variance_loss) f32 scalars
    """
    n, c = logits.shape
    assert c == end_age - start_age + 1, "logit width must match age range"

    itemsize = jnp.dtype(logits.dtype).itemsize
    tile_n = _pick_tile_rows(n, c, itemsize, max_tile_rows)
    grid = (pl.cdiv(n, tile_n),)

    # Constant centered moment matrix: rows [1, a', a'^2], zero-padded to 8
    # sublanes, with a' = a - (start_age + end_age)/2.
    age_mid = (start_age + end_age) / 2.0
    ages = jnp.arange(start_age, end_age + 1, dtype=jnp.float32) - jnp.float32(age_mid)
    mt = jnp.concatenate(
        [jnp.stack([jnp.ones_like(ages), ages, ages * ages], axis=0),
         jnp.zeros((5, c), dtype=jnp.float32)], axis=0)          # (8, C)

    # Lane-dense target row; reshape only (no dtype cast -> no extra HBM pass).
    t2d = target.reshape(1, n)

    kernel = functools.partial(_mean_variance_kernel, age_mid=age_mid)

    bytes_accessed = (n * c * itemsize                 # logits read
                      + n * t2d.dtype.itemsize         # targets read
                      + 2 * n * 4                      # per-row outputs write
                      + 8 * c * 4)                     # moment matrix
    cost = pl.CostEstimate(flops=20 * n * c, transcendentals=n * c,
                           bytes_accessed=bytes_accessed)

    se_rows, var_rows = pl.pallas_call(
        kernel,
        grid=grid,
        in_specs=[
            pl.BlockSpec((8, c), lambda i: (0, 0)),        # moment matrix (resident)
            pl.BlockSpec((tile_n, c), lambda i: (i, 0)),   # logits tile (pipelined)
            pl.BlockSpec((1, tile_n), lambda i: (0, i)),   # lane-dense target tile
        ],
        out_specs=(
            pl.BlockSpec((1, tile_n), lambda i: (0, i)),   # per-row squared error
            pl.BlockSpec((1, tile_n), lambda i: (0, i)),   # per-row variance
        ),
        out_shape=(
            jax.ShapeDtypeStruct((1, n), jnp.float32),
            jax.ShapeDtypeStruct((1, n), jnp.float32),
        ),
        compiler_params=pltpu.CompilerParams(
            dimension_semantics=("parallel",)),            # v7x: shard tiles over 2 TCs
        cost_estimate=cost,
    )(mt, logits, t2d)

    # Tiny wrapper-side reduction (8*N bytes vs 4*C*N streamed): exact
    # pairwise/tree sum, also fixes the serial-accumulator precision concern.
    mean_loss = jnp.float32(0.5) * jnp.mean(se_rows)
    variance_loss = jnp.mean(var_rows)
    return mean_loss, variance_loss


def _reference(logits, target, start_age, end_age):
    x = logits.astype(jnp.float32)
    t = target.astype(jnp.float32)
    p = jax.nn.softmax(x, axis=1)
    a = jnp.arange(start_age, end_age + 1, dtype=jnp.float32)
    mean = jnp.sum(p * a[None, :], axis=1)
    mean_loss = jnp.mean((mean - t) ** 2) / 2.0
    b = (a[None, :] - mean[:, None]) ** 2
    variance_loss = jnp.mean(jnp.sum(p * b, axis=1))
    return mean_loss, variance_loss


if __name__ == "__main__":
    start_age, end_age = 0, 63                  # C = 64 ages
    C = end_age - start_age + 1
    key = jax.random.PRNGKey(0)
    k1, k2, k3, k4 = jax.random.split(key, 4)

    # Case 1: tiny batch, single tile (block == full array dims).
    n1 = 8
    logits1 = jax.random.normal(k1, (n1, C), dtype=jnp.float32)
    target1 = jax.random.randint(k2, (n1,), start_age, end_age + 1).astype(jnp.float32)
    out1 = mean_variance_loss_mtl(logits1, target1,
                                  start_age=start_age, end_age=end_age)
    jax.block_until_ready(out1)
    ref1 = _reference(logits1, target1, start_age, end_age)
    assert jnp.allclose(out1[0], ref1[0], rtol=1e-4, atol=1e-4), (out1[0], ref1[0])
    assert jnp.allclose(out1[1], ref1[1], rtol=1e-4, atol=1e-4), (out1[1], ref1[1])

    # Case 2: multi-tile grid with a partial (padded) final tile — exercises
    # the pipelined path, edge-block writeback clamping, and the parallel axis.
    n2 = 200
    logits2 = jax.random.normal(k3, (n2, C), dtype=jnp.float32)
    target2 = jax.random.randint(k4, (n2,), start_age, end_age + 1).astype(jnp.float32)
    out2 = mean_variance_loss_mtl(logits2, target2,
                                  start_age=start_age, end_age=end_age,
                                  max_tile_rows=128)
    jax.block_until_ready(out2)
    ref2 = _reference(logits2, target2, start_age, end_age)
    assert jnp.allclose(out2[0], ref2[0], rtol=1e-4, atol=1e-4), (out2[0], ref2[0])
    assert jnp.allclose(out2[1], ref2[1], rtol=1e-4, atol=1e-4), (out2[1], ref2[1])

    # Case 3: bf16 logits streamed in native dtype (upcast happens in-kernel).
    logits3 = logits2.astype(jnp.bfloat16)
    out3 = mean_variance_loss_mtl(logits3, target2,
                                  start_age=start_age, end_age=end_age,
                                  max_tile_rows=128)
    jax.block_until_ready(out3)
    ref3 = _reference(logits3, target2, start_age, end_age)
    assert jnp.allclose(out3[0], ref3[0], rtol=1e-4, atol=1e-4), (out3[0], ref3[0])
    assert jnp.allclose(out3[1], ref3[1], rtol=1e-4, atol=1e-4), (out3[1], ref3[1])

    print("KERNEL_OK")
</pallas_src>

<mosaic_0001>
module attributes {stable_mosaic.version = 11 : i64} {
  func.func @_mean_variance_kernel(%arg0: i32, %arg1: memref<8x64xf32, #tpu.memory_space<vmem>>, %arg2: memref<8x64xf32, #tpu.memory_space<vmem>>, %arg3: memref<1x8xf32, #tpu.memory_space<vmem>>, %arg4: memref<1x8xf32, #tpu.memory_space<vmem>>, %arg5: memref<1x8xf32, #tpu.memory_space<vmem>>) attributes {dimension_semantics = [#tpu.dimension_semantics<parallel>], iteration_bounds = array<i64: 1>, scalar_prefetch = 0 : i64, scratch_operands = 0 : i64, tpu.core_type = #tpu.core_type<tc>, window_params = [{pipeline_mode = #tpu.pipeline_mode<synchronous>, transform_indices = @transform_0, window_bounds = array<i64: 8, 64>}, {transform_indices = @transform_1, window_bounds = array<i64: 8, 64>}, {transform_indices = @transform_2, window_bounds = array<i64: 1, 8>}, {transform_indices = @transform_3, window_bounds = array<i64: 1, 8>}, {transform_indices = @transform_4, window_bounds = array<i64: 1, 8>}]} {
    %c0 = arith.constant 0 : index
    %c0_0 = arith.constant 0 : index
    %0 = vector.load %arg2[%c0, %c0_0] : memref<8x64xf32, #tpu.memory_space<vmem>>, vector<8x64xf32>
    %c0_1 = arith.constant 0 : index
    %c0_2 = arith.constant 0 : index
    %1 = vector.load %arg3[%c0_1, %c0_2] : memref<1x8xf32, #tpu.memory_space<vmem>>, vector<1x8xf32>
    %c0_3 = arith.constant 0 : index
    %c0_4 = arith.constant 0 : index
    %2 = vector.load %arg1[%c0_3, %c0_4] : memref<8x64xf32, #tpu.memory_space<vmem>>, vector<8x64xf32>
    %cst = arith.constant dense<0xFF800000> : vector<8xf32>
    %3 = vector.multi_reduction <maximumf>, %0, %cst [1] : vector<8x64xf32> to vector<8xf32>
    %4 = vector.shape_cast %3 : vector<8xf32> to vector<8x1xf32>
    %5 = vector.broadcast %4 : vector<8x1xf32> to vector<8x64xf32>
    %6 = arith.subf %0, %5 : vector<8x64xf32>
    %7 = math.exp %6 : vector<8x64xf32>
    %cst_5 = arith.constant dense<0.000000e+00> : vector<8x8xf32>
    %8 = tpu.matmul %2, %7, %cst_5 {dimension_numbers = #tpu.dot_dimension_numbers<[1], [1], [0], [0], [0, 0, 1, 0], [], []>} : vector<8x64xf32>, vector<8x64xf32>, vector<8x8xf32> -> vector<8x8xf32>
    %9 = vector.extract_strided_slice %8 {offsets = [0, 0], sizes = [1, 8], strides = [1, 1]} : vector<8x8xf32> to vector<1x8xf32>
    %10 = vector.extract_strided_slice %8 {offsets = [1, 0], sizes = [1, 8], strides = [1, 1]} : vector<8x8xf32> to vector<1x8xf32>
    %11 = vector.extract_strided_slice %8 {offsets = [2, 0], sizes = [1, 8], strides = [1, 1]} : vector<8x8xf32> to vector<1x8xf32>
    %12 = tpu.reciprocal %9 : vector<1x8xf32> -> vector<1x8xf32>
    %13 = arith.mulf %10, %12 : vector<1x8xf32>
    %14 = arith.mulf %11, %12 : vector<1x8xf32>
    %15 = arith.mulf %13, %13 : vector<1x8xf32>
    %16 = arith.subf %14, %15 : vector<1x8xf32>
    %cst_6 = arith.constant 3.150000e+01 : f32
    %17 = vector.broadcast %cst_6 : f32 to vector<1x8xf32>
    %18 = arith.addf %13, %17 : vector<1x8xf32>
    %19 = arith.subf %18, %1 : vector<1x8xf32>
    %20 = arith.mulf %19, %19 : vector<1x8xf32>
    %c0_7 = arith.constant 0 : index
    %c0_8 = arith.constant 0 : index
    %21 = vector.load %arg4[%c0_7, %c0_8] : memref<1x8xf32, #tpu.memory_space<vmem>>, vector<1x8xf32>
    tpu.vector_store %arg4[%c0_7, %c0_8], %20 {strides = array<i32>} : memref<1x8xf32, #tpu.memory_space<vmem>>, vector<1x8xf32>,
    %c0_9 = arith.constant 0 : index
    %c0_10 = arith.constant 0 : index
    %22 = vector.load %arg5[%c0_9, %c0_10] : memref<1x8xf32, #tpu.memory_space<vmem>>, vector<1x8xf32>
    tpu.vector_store %arg5[%c0_9, %c0_10], %16 {strides = array<i32>} : memref<1x8xf32, #tpu.memory_space<vmem>>, vector<1x8xf32>,
    return
  }
  func.func @transform_0(%arg0: i32) -> (i32, i32) {
    %c0_i32 = arith.constant 0 : i32
    %c0_i32_0 = arith.constant 0 : i32
    %c0_i32_1 = arith.constant 0 : i32
    return %c0_i32, %c0_i32_0 : i32, i32
  }
  func.func @transform_1(%arg0: i32) -> (i32, i32) {
    %c0_i32 = arith.constant 0 : i32
    %c0_i32_0 = arith.constant 0 : i32
    return %arg0, %c0_i32 : i32, i32
  }
  func.func @transform_2(%arg0: i32) -> (i32, i32) {
    %c0_i32 = arith.constant 0 : i32
    %c0_i32_0 = arith.constant 0 : i32
    return %c0_i32, %arg0 : i32, i32
  }
  func.func @transform_3(%arg0: i32) -> (i32, i32) {
    %c0_i32 = arith.constant 0 : i32
    %c0_i32_0 = arith.constant 0 : i32
    return %c0_i32, %arg0 : i32, i32
  }
  func.func @transform_4(%arg0: i32) -> (i32, i32) {
    %c0_i32 = arith.constant 0 : i32
    %c0_i32_0 = arith.constant 0 : i32
    return %c0_i32, %arg0 : i32, i32
  }
}

</mosaic_0001>

<llo_original>
// kernel: tpu_custom_call.1
$region0: #{tpu_custom_call.1}
  #allocation0 [shape = 'u32[]', space=smem, size = 0x4, offset = 0x4, fixed_abs, tag = 'smem constant byte address 0x4 - core index']
  #allocation1 [shape = 'u32[144,128]{1,0:T(1,128)}', space=vmem, size = 0x12000, scoped, tag = 'internal scratch']
  %s0 = inlined_call_operand.hbm [shape: f32[8,64], index: 0, kind: input, shape index: {}]
  %s1 = inlined_call_operand.hbm [shape: f32[8,64], index: 1, kind: input, shape index: {}]
  %s2 = inlined_call_operand.vmem [shape: f32[1,8], index: 2, kind: input, shape index: {}]
  %s3 = inlined_call_operand.hbm [shape: f32[1,8], index: 3, kind: output, shape index: {0}]
  %s4 = inlined_call_operand.hbm [shape: f32[1,8], index: 4, kind: output, shape index: {1}]
  %5 = xla_tuple %s3, %s4
  %s6 = sld [smem:[#allocation0]]
  $region38: #{tpu_custom_call.1} parent=0
    _
  %s8 = ssub.s32 1, %s6
  %s9 = scalar_select 0, %s8, %s6
  $region1: #{tpu_custom_call.1} parent=0
    #allocation2 [shape = 'u8[4096]{0}', space=vmem, size = 0x1000, scoped, tag = 'input window, operand 0, single buffered']
    #allocation3 [shape = 's32[1]{0}', space=sflag, size = 0x4, scoped, tag = 'scoped memory for tpu_custom_call.1']
    #allocation4 [shape = 's32[1]{0}', space=sflag, size = 0x4, scoped, tag = 'scoped memory for tpu_custom_call.1']
    #allocation5 [shape = 'u8[4096]{0}', space=vmem, size = 0x1000, scoped, tag = 'input window, operand 1, single buffered']
    #allocation6 [shape = 's32[1]{0}', space=sflag, size = 0x4, scoped, tag = 'scoped memory for tpu_custom_call.1']
    #allocation7 [shape = 'u8[512]{0}', space=vmem, size = 0x400, scoped, tag = 'output window, operand 0, single buffered']
    #allocation8 [shape = 'u8[512]{0}', space=vmem, size = 0x400, scoped, tag = 'output window, operand 1, single buffered']
    #allocation9 [shape = 's32[1]{0}', space=sflag, size = 0x4, scoped, tag = 'scoped memory for tpu_custom_call.1']
    %10 = vsyncpa [#allocation3], 0
    %11 = vsyncpa [#allocation6], 0
    %12 = vsyncpa [#allocation4], 0
    %13 = vsyncpa [#allocation9], 0
    // Predicated region
    $region2: #{tpu_custom_call.1} parent=1 // pred_check
      _
    $region3: #{tpu_custom_call.1} parent=1 // pred_check_branch
      %15 = sbr.rel (0) target = $region5
    $region4: #{tpu_custom_call.1} parent=1 // pred_region
      %s17 = ssub.s32 128, 128
      %18 = vsyncadd [#allocation3], %s17
      %s20 = sshll.u32 [#allocation2], 4
      %s21 = int_to_ptr.vmem [resolvable:$true] %s20
      %23 = dma.hbm_to_vmem [thread:$0]  %s0, 128, %s21, [#allocation3]
    $region5: #{tpu_custom_call.1} parent=1 // pred_fallthru
      _
    // Predicated region
    $region6: #{tpu_custom_call.1} parent=1 // pred_check
      _
    $region7: #{tpu_custom_call.1} parent=1 // pred_check_branch
      %25 = sbr.rel (0) target = $region9
    $region8: #{tpu_custom_call.1} parent=1 // pred_region
      %s27 = ssub.s32 128, 128
      %28 = vsyncadd [#allocation6], %s27
      %s30 = sshll.u32 [#allocation5], 4
      %s31 = int_to_ptr.vmem [resolvable:$true] %s30
      %33 = dma.hbm_to_vmem [thread:$0]  %s1, 128, %s31, [#allocation6]
    $region9: #{tpu_custom_call.1} parent=1 // pred_fallthru
      _
    // Predicated region
    $region10: #{tpu_custom_call.1} parent=1 // pred_check
      _
    $region11: #{tpu_custom_call.1} parent=1 // pred_check_branch
      %35 = sbr.rel (0) target = $region13
    $region12: #{tpu_custom_call.1} parent=1 // pred_region
      _
    $region13: #{tpu_custom_call.1} parent=1 // pred_fallthru
      _
    // Predicated region
    $region14: #{tpu_custom_call.1} parent=1 // pred_check
      _
    $region15: #{tpu_custom_call.1} parent=1 // pred_check_branch
      %37 = sbr.rel (0) target = $region17
    $region16: #{tpu_custom_call.1} parent=1 // pred_region
      %38 = dma.done [#allocation3], 128
    $region17: #{tpu_custom_call.1} parent=1 // pred_fallthru
      _
    // Predicated region
    $region18: #{tpu_custom_call.1} parent=1 // pred_check
      _
    $region19: #{tpu_custom_call.1} parent=1 // pred_check_branch
      %40 = sbr.rel (0) target = $region21
    $region20: #{tpu_custom_call.1} parent=1 // pred_region
      %41 = dma.done [#allocation6], 128
    $region21: #{tpu_custom_call.1} parent=1 // pred_fallthru
      _
    %v42 = vld [vmem:[#allocation5] sm:$0xff]
    %v43 = vld [vmem:[%s2] sm:$0x1]
    %v44 = vld [vmem:[#allocation2] sm:$0xff]
    %vm45 = vcmask 523264
    %v46 = vsel %vm45, %v42, -inf
    %47 = vmax.xlane.f32.xlu0 %v46
    %v48 = vpop.xlane.xlu0 %47
    %v49 = vsub.f32 %v42, %v48
    %v50 = vmul.f32 %v49, 1.442695
    %v51 = vpow.pop %v50
    %v53 = vsel %vm45, %v44, 0
    %v56 = vsel %vm45, %v51, 0
    %58 = vmatprep.subr.mxu0 0.0
    %59 = vmatpush1.xpose.msra.mxu0 0.0
    %60 = vmatprep.subr.mxu0 0.0
    %61 = vmatpush1.xpose.msra.mxu0 0.0
    %62 = vmatprep.subr.mxu0 0.0
    %63 = vmatpush1.xpose.msra.mxu0 0.0
    %64 = vmatprep.subr.mxu0 0.0
    %65 = vmatpush1.xpose.msra.mxu0 0.0
    %66 = vmatprep.subr.mxu0 0.0
    %67 = vmatpush1.xpose.msra.mxu0 0.0
    %68 = vmatprep.subr.mxu0 0.0
    %69 = vmatpush1.xpose.msra.mxu0 0.0
    %70 = vmatprep.subr.mxu0 0.0
    %71 = vmatpush1.xpose.msra.mxu0 0.0
    %72 = vmatprep.subr.mxu0 0.0
    %73 = vmatpush1.xpose.msra.mxu0 0.0
    %74 = vmatprep.subr.mxu0 0.0
    %75 = vmatpush1.xpose.msra.mxu0 0.0
    %76 = vmatprep.subr.mxu0 0.0
    %77 = vmatpush1.xpose.msra.mxu0 0.0
    %78 = vmatprep.subr.mxu0 0.0
    %79 = vmatpush1.xpose.msra.mxu0 0.0
    %80 = vmatprep.subr.mxu0 0.0
    %81 = vmatpush1.xpose.msra.mxu0 0.0
    %82 = vmatprep.subr.mxu0 0.0
    %83 = vmatpush1.xpose.msra.mxu0 0.0
    %84 = vmatprep.subr.mxu0 0.0
    %85 = vmatpush1.xpose.msra.mxu0 0.0
    %86 = vmatprep.subr.mxu0 0.0
    %87 = vmatpush1.xpose.msra.mxu0 0.0
    %88 = vmatprep.subr.mxu0 0.0
    %89 = vmatpush1.xpose.msra.mxu0 %v56
    %90 = vmatprep.subr.mxu0 0.0
    %91 = vmatpush2.xpose.msra.mxu0 0.0
    %92 = vmatprep.subr.mxu0 0.0
    %93 = vmatpush2.xpose.msra.mxu0 0.0
    %94 = vmatprep.subr.mxu0 0.0
    %95 = vmatpush2.xpose.msra.mxu0 0.0
    %96 = vmatprep.subr.mxu0 0.0
    %97 = vmatpush2.xpose.msra.mxu0 0.0
    %98 = vmatprep.subr.mxu0 0.0
    %99 = vmatpush2.xpose.msra.mxu0 0.0
    %100 = vmatprep.subr.mxu0 0.0
    %101 = vmatpush2.xpose.msra.mxu0 0.0
    %102 = vmatprep.subr.mxu0 0.0
    %103 = vmatpush2.xpose.msra.mxu0 0.0
    %104 = vmatprep.subr.mxu0 0.0
    %105 = vmatpush2.xpose.msra.mxu0 0.0
    %106 = vmatprep.subr.mxu0 0.0
    %107 = vmatpush2.xpose.msra.mxu0 0.0
    %108 = vmatprep.subr.mxu0 0.0
    %109 = vmatpush2.xpose.msra.mxu0 0.0
    %110 = vmatprep.subr.mxu0 0.0
    %111 = vmatpush2.xpose.msra.mxu0 0.0
    %112 = vmatprep.subr.mxu0 0.0
    %113 = vmatpush2.xpose.msra.mxu0 0.0
    %114 = vmatprep.subr.mxu0 0.0
    %115 = vmatpush2.xpose.msra.mxu0 0.0
    %116 = vmatprep.subr.mxu0 0.0
    %117 = vmatpush2.xpose.msra.mxu0 0.0
    %118 = vmatprep.subr.mxu0 0.0
    %119 = vmatpush2.xpose.msra.mxu0 0.0
    %120 = vmatprep.subr.mxu0 0.0
    %121 = vmatpush2.xpose.msra.mxu0 0.0
    %122 = vmatprep.mubr.f32.mxu0 0.0
    %123 = vmatmul.mubr.f32.gmra.mxu0 %v53
    %v124 = vpop.f32.mrf.mxu0
    %v125 = vadd.f32 0.0, %v124
    %v126 = vpop.f32.mrf.mxu0
    %127 = vdwg.mxu0
    %v128 = vrcp.pop %v125
    %v130 = vrot.slane %v128, 7
    %v132 = vmul.f32 %v125, %v130
    %v133 = vrot.slane %v128, 6
    %v135 = vmul.f32 %v125, %v133
    %v136 = vmul.f32 %v132, %v132
    %v138 = vrot.slane %v136, 7
    %v140 = vsub.f32 %v135, %v138
    %v141 = vadd.f32 %v132, 31.5
    %v143 = vlaneseq
    %v144 = vshrl.u32 %v143, 7
    %v145 = vsub.s32 0, %v144
    %v146 = vrot.slane %v43, %v145
    %v148 = vsub.f32 %v141, %v146
    %v149 = vmul.f32 %v148, %v148
    %vm150 = vcmask 58369
    %151 = vst.msk [vmem:[#allocation7 - $0x1] sm:$0x2] %vm150, %v149
    %vm152 = vcmask 59394
    %153 = vst.msk [vmem:[#allocation8 - $0x2] sm:$0x4] %vm152, %v140
    // Predicated region
    $region22: #{tpu_custom_call.1} parent=1 // pred_check
      _
    $region23: #{tpu_custom_call.1} parent=1 // pred_check_branch
      %155 = sbr.rel (0) target = $region25
    $region24: #{tpu_custom_call.1} parent=1 // pred_region
      %s157 = ssub.s32 16, 16
      %158 = vsyncadd [#allocation4], %s157
      %s160 = sshll.u32 [#allocation7], 4
      %s161 = int_to_ptr.vmem [resolvable:$true] %s160
      %163 = dma.vmem_to_hbm [thread:$0]  %s161, 16, %s3, [#allocation4]
    $region25: #{tpu_custom_call.1} parent=1 // pred_fallthru
      _
    // Predicated region
    $region26: #{tpu_custom_call.1} parent=1 // pred_check
      _
    $region27: #{tpu_custom_call.1} parent=1 // pred_check_branch
      %165 = sbr.rel (0) target = $region29
    $region28: #{tpu_custom_call.1} parent=1 // pred_region
      %s167 = ssub.s32 16, 16
      %168 = vsyncadd [#allocation9], %s167
      %s170 = sshll.u32 [#allocation8], 4
      %s171 = int_to_ptr.vmem [resolvable:$true] %s170
      %173 = dma.vmem_to_hbm [thread:$0]  %s171, 16, %s4, [#allocation9]
    $region29: #{tpu_custom_call.1} parent=1 // pred_fallthru
      _
    // Predicated region
    $region30: #{tpu_custom_call.1} parent=1 // pred_check
      _
    $region31: #{tpu_custom_call.1} parent=1 // pred_check_branch
      %175 = sbr.rel (0) target = $region33
    $region32: #{tpu_custom_call.1} parent=1 // pred_region
      %176 = dma.done [#allocation4], 16
    $region33: #{tpu_custom_call.1} parent=1 // pred_fallthru
      _
    // Predicated region
    $region34: #{tpu_custom_call.1} parent=1 // pred_check
      _
    $region35: #{tpu_custom_call.1} parent=1 // pred_check_branch
      %178 = sbr.rel (0) target = $region37
    $region36: #{tpu_custom_call.1} parent=1 // pred_region
      %179 = dma.done [#allocation9], 16
    $region37: #{tpu_custom_call.1} parent=1 // pred_fallthru
      _
    %180 = vsyncpa [#allocation3], 1
    %181 = vsyncpa [#allocation6], 1
    %182 = vsyncpa [#allocation4], 1
    %183 = vsyncpa [#allocation9], 1

</llo_original>
